<compile_context>
chip_gen: v7x
topology: tpu7x:2x2x1
jax: 0.10.0
libtpu: 0.0.40
codegen_flags: <defaults>
</compile_context>

<pallas_src>
import functools

import jax
import jax.numpy as jnp
from jax.experimental import pallas as pl
from jax.experimental.pallas import tpu as pltpu


def _round_up(x, m):
    return ((x + m - 1) // m) * m


def _conv_tap_kernel(x_ref, w_ref, b_ref, o_ref, *, kh, kw, wp, la):
    """One (image, Cout-tile) grid step of fused conv + bias + ReLU.

    x_ref: (1, Cin, Lx)       bf16  flattened, spatially pre-padded image
    w_ref: (kh*kw, tc, Cin)   bf16  per-tap weight matrices W[:, :, i, j]
    b_ref: (tc, 1)            f32
    o_ref: (1, tc, La)        f32   La = Ho * Wp (row-major output slab)

    For stride-1 convs, output pixel (ho, wo) lives at flat column ho*Wp + wo,
    and tap (i, j) reads flat input column (ho+i)*Wp + (wo+j)
    = (i*Wp + j) + (ho*Wp + wo): every tap is a shifted length-La slice, so the
    whole conv is kh*kw small MXU matmuls accumulated in f32.
    """
    tc = o_ref.shape[1]
    acc = jnp.zeros((tc, la), jnp.float32)
    for i in range(kh):
        for j in range(kw):
            xs = x_ref[0, :, pl.ds(i * wp + j, la)]            # (Cin, La) bf16
            acc = acc + jnp.dot(w_ref[i * kw + j], xs,
                                preferred_element_type=jnp.float32)
    out = jnp.maximum(acc + b_ref[...], 0.0)                    # bias+ReLU in f32
    o_ref[0] = out.astype(o_ref.dtype)


def _conv_relu_pallas(x_flat, w_taps, bias_col, *, kh, kw, wp, ho, out_dtype):
    """ReLU(conv + bias) on flattened, pre-padded NCHW images.

    x_flat:   (N, Cin, Lx)        bf16
    w_taps:   (kh*kw, Cout, Cin)  bf16
    bias_col: (Cout, 1)           f32
    returns   (N, Cout, Ho*Wp)    out_dtype
    """
    n, cin, lx = x_flat.shape
    cout = w_taps.shape[1]
    la = ho * wp

    # Cout tiling: full Cout per step when small (typical for this module),
    # 256-wide tiles otherwise.  Ensure >= 2 parallel grid steps so both v7x
    # TensorCores get work even for batch-1 calls.
    tc = cout if cout <= 512 else 256
    gc = pl.cdiv(cout, tc)
    if n * gc < 2 and cout >= 16:
        tc = _round_up(pl.cdiv(cout, 2), 8)
        gc = pl.cdiv(cout, tc)
    grid = (n, gc)

    kernel = functools.partial(_conv_tap_kernel, kh=kh, kw=kw, wp=wp, la=la)

    flops = 2 * n * cout * cin * kh * kw * la
    bytes_accessed = (gc * x_flat.size * 2 + n * w_taps.size * 2
                      + n * bias_col.size * 4 + n * cout * la * 4)

    return pl.pallas_call(
        kernel,
        out_shape=jax.ShapeDtypeStruct((n, cout, la), out_dtype),
        grid=grid,
        in_specs=[
            pl.BlockSpec((1, cin, lx), lambda b, c: (b, 0, 0)),
            pl.BlockSpec((kh * kw, tc, cin), lambda b, c: (0, c, 0)),
            pl.BlockSpec((tc, 1), lambda b, c: (c, 0)),
        ],
        out_specs=pl.BlockSpec((1, tc, la), lambda b, c: (b, c, 0)),
        compiler_params=pltpu.CompilerParams(
            dimension_semantics=("parallel", "parallel"),
            vmem_limit_bytes=48 * 1024 * 1024,   # > default scoped limit, < v7x 64 MiB
        ),
        cost_estimate=pl.CostEstimate(flops=flops,
                                      bytes_accessed=bytes_accessed,
                                      transcendentals=0),
    )(x_flat, w_taps, bias_col)


@functools.partial(jax.jit, static_argnames=("stride", "padding"))
def conv_relu(x, weight, bias, *, stride=1, padding=1):
    """Equivalent of Conv.forward: ReLU(Conv2d(x)), PyTorch NCHW convention.

    x:      (N, Cin, H, W) float32
    weight: (Cout, Cin, kh, kw)
    bias:   (Cout,)
    returns (N, Cout, Ho, Wo), Ho = (H + 2p - kh)//s + 1 (same for Wo).
    """
    n, cin, h, w = x.shape
    cout, _, kh, kw = weight.shape
    out_dtype = x.dtype

    if (kh > 1 or kw > 1) and stride != 1:
        # TODO(synk): no Pallas path yet for strided k>1 convs (e.g. an 11x11/s4
        # stem); fall back to XLA's conv for that configuration.
        out = jax.lax.conv_general_dilated(
            x, weight, (stride, stride),
            [(padding, padding), (padding, padding)],
            dimension_numbers=("NCHW", "OIHW", "NCHW"))
        return jnp.maximum(out + bias.reshape(1, cout, 1, 1), 0.0).astype(out_dtype)

    ho = (h + 2 * padding - kh) // stride + 1
    wo = (w + 2 * padding - kw) // stride + 1

    # bf16 cast (intentional: MXU-native) + single spatial zero-pad in NCHW.
    # kw > 1 gets one extra zero row at the bottom so the shifted flat slices in
    # the kernel never run past the buffer (those extra elements only land in
    # the Wo..Wp-1 junk columns that are dropped below).
    extra_rows = 0 if kw == 1 else 1
    xp = x.astype(jnp.bfloat16)
    if padding > 0 or extra_rows > 0:
        xp = jnp.pad(xp, ((0, 0), (0, 0),
                          (padding, padding + extra_rows), (padding, padding)))
    if kh == 1 and kw == 1 and stride > 1:
        xp = xp[:, :, ::stride, ::stride]     # 1x1 conv commutes with striding

    _, _, hx, wp = xp.shape
    x_flat = xp.reshape(n, cin, hx * wp)      # free reshape (contiguous dims)

    w_taps = (weight.transpose(2, 3, 0, 1)    # (kh, kw, Cout, Cin)
              .reshape(kh * kw, cout, cin).astype(jnp.bfloat16))
    bias_col = bias.reshape(cout, 1).astype(jnp.float32)

    out_flat = _conv_relu_pallas(x_flat, w_taps, bias_col,
                                 kh=kh, kw=kw, wp=wp, ho=ho, out_dtype=out_dtype)
    out = out_flat.reshape(n, cout, ho, wp)
    if wo != wp:                              # k>1: drop the kw-1 junk columns
        out = out[:, :, :, :wo]
    return out


def _reference(x, weight, bias, stride, padding):
    cout = weight.shape[0]
    out = jax.lax.conv_general_dilated(
        x, weight, (stride, stride),
        [(padding, padding), (padding, padding)],
        dimension_numbers=("NCHW", "OIHW", "NCHW"),
        precision=jax.lax.Precision.HIGHEST)
    return jnp.maximum(out + bias.reshape(1, cout, 1, 1), 0.0)


if __name__ == "__main__":
    key = jax.random.PRNGKey(0)
    n, h, w = 2, 16, 16
    in_chan, out_chan = 4, 8

    kx, kw1, kb1, kw2, kb2 = jax.random.split(key, 5)
    x = jax.random.normal(kx, (n, in_chan, h, w), dtype=jnp.float32)

    # 1) Module defaults: kernel_size=1, stride=1, padding=1.
    weight1 = jax.random.normal(kw1, (out_chan, in_chan, 1, 1), jnp.float32) * 0.1
    bias1 = jax.random.normal(kb1, (out_chan,), jnp.float32) * 0.1
    out1 = jax.block_until_ready(conv_relu(x, weight1, bias1, stride=1, padding=1))
    ref1 = _reference(x, weight1, bias1, 1, 1)
    assert out1.shape == (n, out_chan, h + 2, w + 2), out1.shape
    # bf16 MXU operands -> compare against the f32 reference with a bf16-level
    # tolerance (intentional precision choice per the perf review).
    assert jnp.allclose(out1, ref1, atol=5e-2, rtol=5e-2), \
        float(jnp.max(jnp.abs(out1 - ref1)))

    # 2) General path sanity check: 3x3 kernel, stride 1, padding 1
    #    (same fused kernel, 9 shifted-slice taps, no im2col).
    weight2 = jax.random.normal(kw2, (out_chan, in_chan, 3, 3), jnp.float32) * 0.1
    bias2 = jax.random.normal(kb2, (out_chan,), jnp.float32) * 0.1
    out2 = jax.block_until_ready(conv_relu(x, weight2, bias2, stride=1, padding=1))
    ref2 = _reference(x, weight2, bias2, 1, 1)
    assert out2.shape == ref2.shape, (out2.shape, ref2.shape)
    assert jnp.allclose(out2, ref2, atol=5e-2, rtol=5e-2), \
        float(jnp.max(jnp.abs(out2 - ref2)))

    print("KERNEL_OK")
</pallas_src>

<mosaic_0001>
module attributes {stable_mosaic.version = 11 : i64} {
  func.func @_conv_tap_kernel(%arg0: i32, %arg1: i32, %arg2: memref<1x4x324xbf16, #tpu.memory_space<vmem>>, %arg3: memref<1x8x4xbf16, #tpu.memory_space<vmem>>, %arg4: memref<8x1xf32, #tpu.memory_space<vmem>>, %arg5: memref<1x8x324xf32, #tpu.memory_space<vmem>>) attributes {dimension_semantics = [#tpu.dimension_semantics<parallel>, #tpu.dimension_semantics<parallel>], iteration_bounds = array<i64: 2, 1>, scalar_prefetch = 0 : i64, scratch_operands = 0 : i64, tpu.core_type = #tpu.core_type<tc>, window_params = [{transform_indices = @transform_0, window_bounds = array<i64: 1, 4, 324>}, {transform_indices = @transform_1, window_bounds = array<i64: 1, 8, 4>}, {transform_indices = @transform_2, window_bounds = array<i64: 8, 1>}, {transform_indices = @transform_3, window_bounds = array<i64: 1, 8, 324>}]} {
    %cst = arith.constant 0.000000e+00 : f32
    %0 = vector.broadcast %cst : f32 to vector<8x324xf32>
    %c0 = arith.constant 0 : index
    %c0_0 = arith.constant 0 : index
    %c0_1 = arith.constant 0 : index
    %1 = vector.load %arg2[%c0, %c0_0, %c0_1] : memref<1x4x324xbf16, #tpu.memory_space<vmem>>, vector<1x4x324xbf16>
    %2 = vector.shape_cast %1 : vector<1x4x324xbf16> to vector<4x324xbf16>
    %c0_2 = arith.constant 0 : index
    %c0_3 = arith.constant 0 : index
    %c0_4 = arith.constant 0 : index
    %3 = vector.load %arg3[%c0_2, %c0_3, %c0_4] : memref<1x8x4xbf16, #tpu.memory_space<vmem>>, vector<1x8x4xbf16>
    %4 = vector.shape_cast %3 : vector<1x8x4xbf16> to vector<8x4xbf16>
    %cst_5 = arith.constant dense<0.000000e+00> : vector<8x324xf32>
    %5 = tpu.matmul %4, %2, %cst_5 {dimension_numbers = #tpu.dot_dimension_numbers<[1], [0], [0], [1], [0, 0, 1, 1], [], []>} : vector<8x4xbf16>, vector<4x324xbf16>, vector<8x324xf32> -> vector<8x324xf32>
    %6 = arith.addf %0, %5 : vector<8x324xf32>
    %c0_6 = arith.constant 0 : index
    %c0_7 = arith.constant 0 : index
    %7 = vector.load %arg4[%c0_6, %c0_7] : memref<8x1xf32, #tpu.memory_space<vmem>>, vector<8x1xf32>
    %8 = vector.broadcast %7 : vector<8x1xf32> to vector<8x324xf32>
    %9 = arith.addf %6, %8 : vector<8x324xf32>
    %cst_8 = arith.constant 0.000000e+00 : f32
    %10 = vector.broadcast %cst_8 : f32 to vector<8x324xf32>
    %11 = arith.maximumf %9, %10 : vector<8x324xf32>
    %c0_9 = arith.constant 0 : index
    %c0_10 = arith.constant 0 : index
    %c0_11 = arith.constant 0 : index
    %12 = vector.load %arg5[%c0_9, %c0_10, %c0_11] : memref<1x8x324xf32, #tpu.memory_space<vmem>>, vector<1x8x324xf32>
    %13 = vector.shape_cast %12 : vector<1x8x324xf32> to vector<8x324xf32>
    %14 = vector.shape_cast %11 : vector<8x324xf32> to vector<1x8x324xf32>
    tpu.vector_store %arg5[%c0_9, %c0_10, %c0_11], %14 {strides = array<i32>} : memref<1x8x324xf32, #tpu.memory_space<vmem>>, vector<1x8x324xf32>,
    return
  }
  func.func @transform_0(%arg0: i32, %arg1: i32) -> (i32, i32, i32) {
    %c0_i32 = arith.constant 0 : i32
    %c0_i32_0 = arith.constant 0 : i32
    %c0_i32_1 = arith.constant 0 : i32
    return %arg0, %c0_i32, %c0_i32_0 : i32, i32, i32
  }
  func.func @transform_1(%arg0: i32, %arg1: i32) -> (i32, i32, i32) {
    %c0_i32 = arith.constant 0 : i32
    %c0_i32_0 = arith.constant 0 : i32
    %c0_i32_1 = arith.constant 0 : i32
    return %c0_i32, %arg1, %c0_i32_0 : i32, i32, i32
  }
  func.func @transform_2(%arg0: i32, %arg1: i32) -> (i32, i32) {
    %c0_i32 = arith.constant 0 : i32
    %c0_i32_0 = arith.constant 0 : i32
    return %arg1, %c0_i32 : i32, i32
  }
  func.func @transform_3(%arg0: i32, %arg1: i32) -> (i32, i32, i32) {
    %c0_i32 = arith.constant 0 : i32
    %c0_i32_0 = arith.constant 0 : i32
    return %arg0, %arg1, %c0_i32 : i32, i32, i32
  }
}

</mosaic_0001>

<llo_original>
// kernel: conv_relu.1
$region0: #{conv_relu.1}
  #allocation0 [shape = 'u32[]', space=smem, size = 0x4, offset = 0x4, fixed_abs, tag = 'smem constant byte address 0x4 - core index']
  #allocation1 [shape = 'u32[144,128]{1,0:T(1,128)}', space=vmem, size = 0x12000, scoped, tag = 'internal scratch']
  %s0 = inlined_call_operand.vmem [shape: bf16[2,4,324], index: 0, kind: input, shape index: {}]
  %s1 = inlined_call_operand.vmem [shape: bf16[1,8,4], index: 1, kind: input, shape index: {}]
  %s2 = inlined_call_operand.vmem [shape: f32[8,1], index: 2, kind: input, shape index: {}]
  %s3 = inlined_call_operand.vmem [shape: f32[2,8,324], index: 3, kind: output, shape index: {}]
  %s4 = sld [smem:[#allocation0]]
  $region45: #{conv_relu.1} parent=0
    _
  %s6 = ssub.s32 1, %s4
  %s7 = scalar_select 0, %s6, %s4
  loop: start=0, step=1, limit=4
  $region2: #{conv_relu.1} parent=0 // loop_pre_header
    _
  $region3: #{conv_relu.1} parent=0 // loop_header
    %s9 = sphi 0, %s13
    %p10 = scmp.ge.s32.totalorder %s9, 4
    %s16 = sphi 0, %s28
    %s17 = sphi 0, %s24
    %s18 = sphi 0, %s16
    %s19 = sphi 0, %s17
    %s20 = sphi 0, %s18
    %s21 = sphi 0, %s19
    %s31 = sphi 0, %s33
    %s34 = sphi 0, %s31
    %s35 = sphi 0, %s34
    %s51 = sphi 0, %s35
    %s57 = sphi 0, %s59
    %s60 = sphi 0, %s57
    %s61 = sphi 0, %s60
    %s77 = sphi 0, %s61
    %s83 = sphi 0, %s85
    %s86 = sphi 0, %s83
    %s87 = sphi 0, %s86
    %s103 = sphi 0, %s87
    %s111 = sphi 0, %s113
    %s114 = sphi 0, %s111
    %s115 = sphi 0, %s114
    %s131 = sphi 0, %s115
  $region4: #{conv_relu.1} parent=0 // loop_header_branch
    %12 = sbr.rel (%p10) target = $region8
  $region5: #{conv_relu.1} parent=0 // loop_body
    %s14 = ssub.s32 %s9, 1
    %s15 = ssub.s32 %s9, 2
    %s22 = sadd.s32 1, %s17
    %p23 = scmp.ge.s32.totalorder %s22, 1
    %s24 = scalar_select %p23, 0, %s22
    %s25 = sadd.s32 1, %s16
    %s26 = scalar_select %p23, %s25, %s16
    %p27 = scmp.ge.s32.totalorder %s26, 2
    %s28 = scalar_select %p27, 0, %s26
    %s29 = ssub.s32 %s16, %s28
    %p30 = scmp.eq.s32.totalorder %s29, 0
    %s32 = sadd.s32 %s31, 1
    %s33 = scalar_select %p30, %s31, %s32
    %p36 = pneg %p30
    %p37 = scmp.eq.s32.totalorder %s9, 1
    %p38 = por %p36, %p37
    %p39 = scmp.ne.s32.totalorder %s31, %s34
    %p40 = scmp.eq.s32.totalorder %s9, 0
    %p41 = por %p39, %p40
    %p42 = scmp.ne.s32.totalorder %s31, %s34
    %p43 = scmp.eq.s32.totalorder %s14, 1
    %p44 = por %p42, %p43
    %p45 = scmp.ne.s32.totalorder %s34, %s35
    %p46 = scmp.eq.s32.totalorder %s14, 0
    %p47 = por %p45, %p46
    %p48 = scmp.ne.s32.totalorder %s34, %s35
    %p49 = scmp.eq.s32.totalorder %s15, 1
    %p50 = por %p48, %p49
    %p52 = scmp.ne.s32.totalorder %s35, %s51
    %p53 = scmp.eq.s32.totalorder %s15, 0
    %p54 = por %p52, %p53
    %s55 = ssub.s32 %s17, %s24
    %p56 = scmp.eq.s32.totalorder %s55, 0
    %s58 = sadd.s32 %s57, 1
    %s59 = scalar_select %p56, %s57, %s58
    %p62 = pneg %p56
    %p63 = scmp.eq.s32.totalorder %s9, 1
    %p64 = por %p62, %p63
    %p65 = scmp.ne.s32.totalorder %s57, %s60
    %p66 = scmp.eq.s32.totalorder %s9, 0
    %p67 = por %p65, %p66
    %p68 = scmp.ne.s32.totalorder %s57, %s60
    %p69 = scmp.eq.s32.totalorder %s14, 1
    %p70 = por %p68, %p69
    %p71 = scmp.ne.s32.totalorder %s60, %s61
    %p72 = scmp.eq.s32.totalorder %s14, 0
    %p73 = por %p71, %p72
    %p74 = scmp.ne.s32.totalorder %s60, %s61
    %p75 = scmp.eq.s32.totalorder %s15, 1
    %p76 = por %p74, %p75
    %p78 = scmp.ne.s32.totalorder %s61, %s77
    %p79 = scmp.eq.s32.totalorder %s15, 0
    %p80 = por %p78, %p79
    %s81 = ssub.s32 %s17, %s24
    %p82 = scmp.eq.s32.totalorder %s81, 0
    %s84 = sadd.s32 %s83, 1
    %s85 = scalar_select %p82, %s83, %s84
    %p88 = pneg %p82
    %p89 = scmp.eq.s32.totalorder %s9, 1
    %p90 = por %p88, %p89
    %p91 = scmp.ne.s32.totalorder %s83, %s86
    %p92 = scmp.eq.s32.totalorder %s9, 0
    %p93 = por %p91, %p92
    %p94 = scmp.ne.s32.totalorder %s83, %s86
    %p95 = scmp.eq.s32.totalorder %s14, 1
    %p96 = por %p94, %p95
    %p97 = scmp.ne.s32.totalorder %s86, %s87
    %p98 = scmp.eq.s32.totalorder %s14, 0
    %p99 = por %p97, %p98
    %p100 = scmp.ne.s32.totalorder %s86, %s87
    %p101 = scmp.eq.s32.totalorder %s15, 1
    %p102 = por %p100, %p101
    %p104 = scmp.ne.s32.totalorder %s87, %s103
    %p105 = scmp.eq.s32.totalorder %s15, 0
    %p106 = por %p104, %p105
    %s107 = ssub.s32 %s16, %s28
    %s108 = ssub.s32 %s17, %s24
    %s109 = sor.u32 %s107, %s108
    %p110 = scmp.eq.s32.totalorder %s109, 0
    %s112 = sadd.s32 %s111, 1
    %s113 = scalar_select %p110, %s111, %s112
    %p116 = pneg %p110
    %p117 = scmp.eq.s32.totalorder %s9, 1
    %p118 = por %p116, %p117
    %p119 = scmp.ne.s32.totalorder %s111, %s114
    %p120 = scmp.eq.s32.totalorder %s9, 0
    %p121 = por %p119, %p120
    %p122 = scmp.ne.s32.totalorder %s111, %s114
    %p123 = scmp.eq.s32.totalorder %s14, 1
    %p124 = por %p122, %p123
    %p125 = scmp.ne.s32.totalorder %s114, %s115
    %p126 = scmp.eq.s32.totalorder %s14, 0
    %p127 = por %p125, %p126
    %p128 = scmp.ne.s32.totalorder %s114, %s115
    %p129 = scmp.eq.s32.totalorder %s15, 1
    %p130 = por %p128, %p129
    %p132 = scmp.ne.s32.totalorder %s115, %s131
    %p133 = scmp.eq.s32.totalorder %s15, 0
    %p134 = por %p132, %p133
    %p135 = scmp.le.s32.totalorder 1, %s9
    %p136 = scmp.lt.s32.totalorder %s9, 3
    %p137 = pnand %p135, %p136
    %p138 = pneg %p137
    // Predicated region
    $region9: #{conv_relu.1} parent=5 // pred_check
      _
    $region10: #{conv_relu.1} parent=5 // pred_check_branch
      %140 = sbr.rel (%p137) target = $region12
    $region11: #{conv_relu.1} parent=5 // pred_region
      %s141 = ssub.s32 %s9, 1
      // Predicated region
      $region13: #{conv_relu.1} parent=11 // pred_check
        %p142 = pneg %p73
      $region14: #{conv_relu.1} parent=11 // pred_check_branch
        %144 = sbr.rel (%p142) target = $region16
      $region15: #{conv_relu.1} parent=11 // pred_region
        %p145 = scmp.lt.s32.totalorder %s19, 0
        %s146 = scalar_select %p145, %s19, 0
        %s147 = smul.addr %s146, 4
        %s148 = scalar_lea.vmem %s1, %s147
      $region16: #{conv_relu.1} parent=11 // pred_fallthru
        _
      // Predicated region
      $region17: #{conv_relu.1} parent=11 // pred_check
        %p149 = pneg %p99
      $region18: #{conv_relu.1} parent=11 // pred_check_branch
        %151 = sbr.rel (%p149) target = $region20
      $region19: #{conv_relu.1} parent=11 // pred_region
        %p152 = scmp.lt.s32.totalorder %s19, 0
        %s153 = scalar_select %p152, %s19, 0
        %s154 = smul.addr %s153, 8
        %s155 = scalar_lea.vmem %s2, %s154
      $region20: #{conv_relu.1} parent=11 // pred_fallthru
        _
    $region12: #{conv_relu.1} parent=5 // pred_fallthru
      _
    %p156 = scmp.lt.s32.totalorder %s9, 2
    // Predicated region
    $region21: #{conv_relu.1} parent=5 // pred_check
      %p157 = pneg %p156
    $region22: #{conv_relu.1} parent=5 // pred_check_branch
      %159 = sbr.rel (%p157) target = $region24
    $region23: #{conv_relu.1} parent=5 // pred_region
      // Predicated region
      $region25: #{conv_relu.1} parent=23 // pred_check
        %p160 = pneg %p41
      $region26: #{conv_relu.1} parent=23 // pred_check_branch
        %162 = sbr.rel (%p160) target = $region28
      $region27: #{conv_relu.1} parent=23 // pred_region
        %p163 = scmp.lt.s32.totalorder %s16, 1
        %s164 = scalar_select %p163, %s16, 1
        %s165 = smul.addr %s164, 3
        %s166 = smul.addr %s165, 2
        %s167 = scalar_lea.vmem %s0, %s166
      $region28: #{conv_relu.1} parent=23 // pred_fallthru
        _
    $region24: #{conv_relu.1} parent=5 // pred_fallthru
      _
    %p168 = scmp.le.s32.totalorder 1, %s9
    %p169 = scmp.lt.s32.totalorder %s9, 3
    %p170 = pnand %p168, %p169
    %p171 = pneg %p170
    // Predicated region
    $region29: #{conv_relu.1} parent=5 // pred_check
      _
    $region30: #{conv_relu.1} parent=5 // pred_check_branch
      %173 = sbr.rel (%p170) target = $region32
    $region31: #{conv_relu.1} parent=5 // pred_region
      %s174 = ssub.s32 %s9, 1
      %p175 = scmp.lt.s32.totalorder %s18, 1
      %s176 = scalar_select %p175, %s18, 1
      %s177 = smul.addr %s176, 3
      %s178 = smul.addr %s177, 2
      %s179 = scalar_lea.vmem %s0, %s178
      %p180 = pneg %p47
      %p181 = pneg %p44
      %p182 = scmp.lt.s32.totalorder %s19, 0
      %s183 = scalar_select %p182, %s19, 0
      %s184 = smul.addr %s183, 4
      %s185 = scalar_lea.vmem %s1, %s184
      %p186 = pneg %p73
      %p187 = pneg %p70
      %p188 = scmp.lt.s32.totalorder %s19, 0
      %s189 = scalar_select %p188, %s19, 0
      %s190 = smul.addr %s189, 8
      %s191 = scalar_lea.vmem %s2, %s190
      %p192 = pneg %p99
      %p193 = pneg %p96
      %p194 = pneg %p127
      %p195 = pneg %p124
      %p196 = scmp.lt.s32.totalorder %s18, 1
      %s197 = scalar_select %p196, %s18, 1
      %p198 = scmp.lt.s32.totalorder %s19, 0
      %s199 = scalar_select %p198, %s19, 0
      %s200 = smul.addr %s199, 3
      %s201 = smul.addr %s197, 3
      %s202 = sadd.s32 %s200, %s201
      %s203 = smul.addr %s202, 8
      %s204 = scalar_lea.vmem %s3, %s203
      %p205 = scmp.lt.s32.totalorder %s18, 1
      %s206 = scalar_select %p205, %s18, 1
      %s207 = smul.addr %s206, 3
      %s208 = smul.addr %s207, 2
      %s209 = scalar_lea.vmem %s0, %s208
      %p210 = scmp.lt.s32.totalorder %s19, 0
      %s211 = scalar_select %p210, %s19, 0
      %s212 = smul.addr %s211, 4
      %s213 = scalar_lea.vmem %s1, %s212
      %p214 = scmp.lt.s32.totalorder %s19, 0
      %s215 = scalar_select %p214, %s19, 0
      %s216 = smul.addr %s215, 8
      %s217 = scalar_lea.vmem %s2, %s216
      %p218 = scmp.lt.s32.totalorder %s18, 1
      %s219 = scalar_select %p218, %s18, 1
      %p220 = scmp.lt.s32.totalorder %s19, 0
      %s221 = scalar_select %p220, %s19, 0
      %s222 = smul.addr %s221, 3
      %s223 = smul.addr %s219, 3
      %s224 = sadd.s32 %s222, %s223
      %s225 = smul.addr %s224, 8
      %s226 = scalar_lea.vmem %s3, %s225
      %v228 = vld [vmem:[%s209] sm:$0x3f]
      %v229 = vld [vmem:[%s213] sm:$0xf]
      %v230 = vld [vmem:[%s217] sm:$0xff]
      %232 = vset.pattern.permute.xlu0 0
      %233 = vperm.xlu0 %232, %v230
      %v234 = vpop.permute.xlu0 %233
      %v237 = vcombine.high %v228, %v228
      %v239 = vunpack.c.l.s4 1983009808
      %v240 = vunpack.c.0.s8 %v239
      %v241 = vlaneseq
      %v242 = vshrl.u32 %v241, 7
      %v243 = vsub.s32 %v240, %v242
      %v244 = vrot.slane %v228, %v243
      %v246 = vunpack.c.l.s4 1983009808
      %v247 = vunpack.c.0.s8 %v246
      %v248 = vlaneseq
      %v249 = vshrl.u32 %v248, 7
      %v250 = vsub.s32 %v247, %v249
      %v251 = vrot.slane %v237, %v250
      %v252 = vcombine.high %v244, %v244
      %vm253 = vcmask 31744
      %v255 = vsel %vm253, %v229, 0
      %vm257 = vcmask 1041408
      %v259 = vsel %vm257, %v244, 0
      %v262 = vsel %vm257, %v252, 0
      %v265 = vsel %vm257, %v251, 0
      %267 = vmatprep.subr.bf16.mxu0 %v262
      %268 = vmatpush1.bf16.msra.mxu0 %v259
      %269 = vmatprep.subr.bf16.mxu0 0
      %270 = vmatpush1.bf16.msra.mxu0 0
      %271 = vmatprep.subr.bf16.mxu0 0
      %272 = vmatpush1.bf16.msra.mxu0 0
      %273 = vmatprep.subr.bf16.mxu0 0
      %274 = vmatpush1.bf16.msra.mxu0 0
      %275 = vmatprep.subr.bf16.mxu0 0
      %276 = vmatpush1.bf16.msra.mxu0 0
      %277 = vmatprep.subr.bf16.mxu0 0
      %278 = vmatpush1.bf16.msra.mxu0 0
      %279 = vmatprep.subr.bf16.mxu0 0
      %280 = vmatpush1.bf16.msra.mxu0 0
      %281 = vmatprep.subr.bf16.mxu0 0
      %282 = vmatpush1.bf16.msra.mxu0 0
      %283 = vmatprep.subr.bf16.mxu0 0
      %284 = vmatpush1.bf16.msra.mxu0 0
      %285 = vmatprep.subr.bf16.mxu0 0
      %286 = vmatpush1.bf16.msra.mxu0 0
      %287 = vmatprep.subr.bf16.mxu0 0
      %288 = vmatpush1.bf16.msra.mxu0 0
      %289 = vmatprep.subr.bf16.mxu0 0
      %290 = vmatpush1.bf16.msra.mxu0 0
      %291 = vmatprep.subr.bf16.mxu0 0
      %292 = vmatpush1.bf16.msra.mxu0 0
      %293 = vmatprep.subr.bf16.mxu0 0
      %294 = vmatpush1.bf16.msra.mxu0 0
      %295 = vmatprep.subr.bf16.mxu0 0
      %296 = vmatpush1.bf16.msra.mxu0 0
      %297 = vmatprep.subr.bf16.mxu0 0
      %298 = vmatpush1.bf16.msra.mxu0 0
      %299 = vmatprep.mubr.bf16.mxu0 0
      %300 = vmatmul.mubr.bf16.gmra.mrb[0].mxu0 %v255
      %v301 = vpop.f32.mrb[0].mxu0
      %v302 = vadd.f32 %v234, %v301
      %v303 = vpop.f32.mrb[0].mxu0
      %v304 = vadd.f32 %v234, %v303
      %v305 = vpop.f32.mrb[0].mxu0
      %v306 = vpop.f32.mrb[0].mxu0
      %307 = vdwg.mxu0
      %308 = vmatprep.subr.bf16.mxu0 0
      %309 = vmatpush1.bf16.msra.mxu0 %v265
      %310 = vmatprep.subr.bf16.mxu0 0
      %311 = vmatpush1.bf16.msra.mxu0 0
      %312 = vmatprep.subr.bf16.mxu0 0
      %313 = vmatpush1.bf16.msra.mxu0 0
      %314 = vmatprep.subr.bf16.mxu0 0
      %315 = vmatpush1.bf16.msra.mxu0 0
      %316 = vmatprep.subr.bf16.mxu0 0
      %317 = vmatpush1.bf16.msra.mxu0 0
      %318 = vmatprep.subr.bf16.mxu0 0
      %319 = vmatpush1.bf16.msra.mxu0 0
      %320 = vmatprep.subr.bf16.mxu0 0
      %321 = vmatpush1.bf16.msra.mxu0 0
      %322 = vmatprep.subr.bf16.mxu0 0
      %323 = vmatpush1.bf16.msra.mxu0 0
      %324 = vmatprep.subr.bf16.mxu0 0
      %325 = vmatpush1.bf16.msra.mxu0 0
      %326 = vmatprep.subr.bf16.mxu0 0
      %327 = vmatpush1.bf16.msra.mxu0 0
      %328 = vmatprep.subr.bf16.mxu0 0
      %329 = vmatpush1.bf16.msra.mxu0 0
      %330 = vmatprep.subr.bf16.mxu0 0
      %331 = vmatpush1.bf16.msra.mxu0 0
      %332 = vmatprep.subr.bf16.mxu0 0
      %333 = vmatpush1.bf16.msra.mxu0 0
      %334 = vmatprep.subr.bf16.mxu0 0
      %335 = vmatpush1.bf16.msra.mxu0 0
      %336 = vmatprep.subr.bf16.mxu0 0
      %337 = vmatpush1.bf16.msra.mxu0 0
      %338 = vmatprep.subr.bf16.mxu0 0
      %339 = vmatpush1.bf16.msra.mxu0 0
      %340 = vmatprep.mubr.bf16.mxu0 0
      %341 = vmatmul.mubr.bf16.gmra.mrb[0].mxu0 %v255
      %v342 = vpop.f32.mrb[0].mxu0
      %v343 = vadd.f32 %v234, %v342
      %v344 = vpop.f32.mrb[0].mxu0
      %v345 = vpop.f32.mrb[0].mxu0
      %v346 = vpop.f32.mrb[0].mxu0
      %347 = vdwg.mxu0
      %v348 = vmax.f32 %v302, 0.0
      %v349 = vmax.f32 %v304, 0.0
      %v350 = vmax.f32 %v343, 0.0
      %351 = vst [vmem:[%s226] sm:$0xff] %v348
      %352 = vst [vmem:[%s226 + $0x8] sm:$0xff] %v349
      %vm353 = vcmask 556032
      %354 = vst.msk [vmem:[%s226 + $0x10] sm:$0xff] %vm353, %v350
      %p355 = scmp.lt.s32.totalorder %s18, 1
      %s356 = scalar_select %p355, %s18, 1
      %p357 = scmp.lt.s32.totalorder %s19, 0
      %s358 = scalar_select %p357, %s19, 0
      %s359 = smul.addr %s358, 3
      %s360 = smul.addr %s356, 3
      %s361 = sadd.s32 %s359, %s360
      %s362 = smul.addr %s361, 8
      %s363 = scalar_lea.vmem %s3, %s362
      // Predicated region
      $region33: #{conv_relu.1} parent=31 // pred_check
        %p364 = pneg %p124
      $region34: #{conv_relu.1} parent=31 // pred_check_branch
        %366 = sbr.rel (%p364) target = $region36
      $region35: #{conv_relu.1} parent=31 // pred_region
        _
      $region36: #{conv_relu.1} parent=31 // pred_fallthru
        _
    $region32: #{conv_relu.1} parent=5 // pred_fallthru
      _
    %p367 = scmp.le.s32.totalorder 2, %s9
    // Predicated region
    $region37: #{conv_relu.1} parent=5 // pred_check
      %p368 = pneg %p367
    $region38: #{conv_relu.1} parent=5 // pred_check_branch
      %370 = sbr.rel (%p368) target = $region40
    $region39: #{conv_relu.1} parent=5 // pred_region
      %s371 = ssub.s32 %s9, 2
      // Predicated region
      $region41: #{conv_relu.1} parent=39 // pred_check
        %p372 = pneg %p130
      $region42: #{conv_relu.1} parent=39 // pred_check_branch
        %374 = sbr.rel (%p372) target = $region44
      $region43: #{conv_relu.1} parent=39 // pred_region
        %p375 = scmp.lt.s32.totalorder %s20, 1
        %s376 = scalar_select %p375, %s20, 1
        %p377 = scmp.lt.s32.totalorder %s21, 0
        %s378 = scalar_select %p377, %s21, 0
        %s379 = smul.addr %s378, 3
        %s380 = smul.addr %s376, 3
        %s381 = sadd.s32 %s379, %s380
        %s382 = smul.addr %s381, 8
        %s383 = scalar_lea.vmem %s3, %s382
      $region44: #{conv_relu.1} parent=39 // pred_fallthru
        _
    $region40: #{conv_relu.1} parent=5 // pred_fallthru
      _
  $region6: #{conv_relu.1} parent=0 // loop_footer
    %s13 = sadd.s32 1, %s9
  $region7: #{conv_relu.1} parent=0 // loop_footer_branch
    %8 = sbr.rel target = $region3
  $region8: #{conv_relu.1} parent=0 // loop_exit
    _

</llo_original>
